<compile_context>
chip_gen: v6e
topology: v6e:2x2x1
jax: 0.10.0
libtpu: 0.0.40
codegen_flags: <defaults>
</compile_context>

<pallas_src>
import jax
import jax.numpy as jnp
from jax.experimental import pallas as pl
from jax.experimental.pallas import tpu as pltpu

EPS = 1e-5          # nn.BatchNorm2d default eps
NEG_SLOPE = 0.01    # nn.LeakyReLU default negative_slope


def _round_up(x, m):
    return ((x + m - 1) // m) * m


# --------------------------------------------------------------------------------------
# Pass 1: conv-as-matmul per M-tile + per-tile partial per-channel sum / sum-of-squares
# --------------------------------------------------------------------------------------
def _conv_stats_kernel(p_ref, w_ref, y_ref, s_ref, ss_ref):
    # (TM, Kpad) @ (Kpad, Cpad) on the MXU, f32 accumulation (operands are bf16).
    y = jnp.dot(p_ref[...], w_ref[...], preferred_element_type=jnp.float32)

    # Per-tile partial batch statistics from the f32 value (exact; padded rows and
    # padded channels contribute exact zeros).  Independent per grid step -> the
    # grid axis can be "parallel" (megacore on v7x).
    ts = jnp.sum(y, axis=0, keepdims=True)        # (1, Cpad)
    tss = jnp.sum(y * y, axis=0, keepdims=True)   # (1, Cpad)
    s_ref[...] = ts[None]                         # (1, 1, Cpad)
    ss_ref[...] = tss[None]

    # Conv intermediate stored at true Cout width in bf16 (halves inter-pass HBM
    # traffic; stats above already used the f32 value).
    cout = y_ref.shape[-1]
    y_ref[...] = y[:, :cout].astype(y_ref.dtype)


# --------------------------------------------------------------------------------------
# Pass 2: folded BatchNorm (scale/shift) + LeakyReLU per M-tile
# --------------------------------------------------------------------------------------
def _norm_act_kernel(y_ref, scale_ref, shift_ref, o_ref):
    z = y_ref[...].astype(jnp.float32) * scale_ref[...] + shift_ref[...]
    o_ref[...] = jnp.where(z >= 0, z, NEG_SLOPE * z)


# --------------------------------------------------------------------------------------
# Wrapper
# --------------------------------------------------------------------------------------
def vqvae_enc_block(x_nchw, w_oihw, bias, gamma, beta, *, tile_m=1024):
    """Forward pass of VQVAEEncBlock.

    x_nchw : (N, Cin, H, W) float32
    w_oihw : (Cout, Cin, 4, 4) float32   (PyTorch Conv2d weight layout)
    bias   : (Cout,) float32             (unused: cancelled exactly by train-mode BN)
    gamma  : (Cout,) float32             (BatchNorm2d weight)
    beta   : (Cout,) float32             (BatchNorm2d bias)
    returns: (N, Cout, Ho, Wo) float32
    """
    del bias  # mean(y + b) = mean(y) + b  =>  bias cancels under BN mean subtraction.

    N, Cin, H, W = x_nchw.shape
    Cout, _, Kh, Kw = w_oihw.shape
    stride, pad = 2, 1
    Ho = (H + 2 * pad - Kh) // stride + 1
    Wo = (W + 2 * pad - Kw) // stride + 1

    M = N * Ho * Wo
    K = Kh * Kw * Cin
    Kpad = _round_up(K, 128)            # MXU contraction dim (zero padded)
    Cpad = _round_up(Cout, 128)         # MXU output dim, kernel-internal only
    TM = _round_up(min(tile_m, _round_up(M, 8)), 8)
    Mpad = _round_up(M, TM)
    nmt = Mpad // TM

    # NCHW -> NHWC, replicate ('edge') spatial padding.
    # TODO(synk): accept/return NHWC directly to drop both activation transposes.
    x_nhwc = jnp.transpose(x_nchw, (0, 2, 3, 1))
    x_pad = jnp.pad(x_nhwc, ((0, 0), (pad, pad), (pad, pad), (0, 0)), mode="edge")

    # im2col: write each (kh, kw) strided slab straight into a single pre-padded
    # bf16 buffer (no intermediate stack + no extra full-size zero-pad copy).
    # TODO(synk): for very large N*Ho*Wo, build patch tiles inside pass 1
    # (memory_space=pl.ANY + manual slab DMA) to avoid im2col HBM read amplification.
    patches_p = jnp.zeros((Mpad, Kpad), jnp.bfloat16)
    col = 0
    for kh in range(Kh):
        for kw in range(Kw):
            slab = x_pad[:, kh:kh + stride * Ho:stride, kw:kw + stride * Wo:stride, :]
            patches_p = patches_p.at[:M, col:col + Cin].set(
                slab.reshape(M, Cin).astype(jnp.bfloat16))
            col += Cin

    # Conv weight (Cout, Cin, Kh, Kw) -> (Kh, Kw, Cin, Cout) -> (K, Cout), bf16, padded.
    w_mat = jnp.transpose(w_oihw, (2, 3, 1, 0)).reshape(K, Cout)
    w_p = jnp.zeros((Kpad, Cpad), jnp.bfloat16).at[:K, :Cout].set(
        w_mat.astype(jnp.bfloat16))

    # ---------------- Pass 1: conv tiles + per-tile partial sum / sumsq ----------------
    flops1 = 2 * Mpad * Kpad * Cpad
    bytes1 = (Mpad * Kpad * 2 + Kpad * Cpad * 2 + Mpad * Cout * 2
              + 2 * nmt * Cpad * 4)
    y_bf16, s_part, ss_part = pl.pallas_call(
        _conv_stats_kernel,
        grid=(nmt,),
        out_shape=(
            jax.ShapeDtypeStruct((Mpad, Cout), jnp.bfloat16),     # conv output y
            jax.ShapeDtypeStruct((nmt, 1, Cpad), jnp.float32),    # partial sums
            jax.ShapeDtypeStruct((nmt, 1, Cpad), jnp.float32),    # partial sumsq
        ),
        in_specs=[
            pl.BlockSpec((TM, Kpad), lambda i: (i, 0)),
            pl.BlockSpec((Kpad, Cpad), lambda i: (0, 0)),
        ],
        out_specs=(
            pl.BlockSpec((TM, Cout), lambda i: (i, 0)),
            pl.BlockSpec((1, 1, Cpad), lambda i: (i, 0, 0)),
            pl.BlockSpec((1, 1, Cpad), lambda i: (i, 0, 0)),
        ),
        compiler_params=pltpu.CompilerParams(
            dimension_semantics=("parallel",)),
        cost_estimate=pl.CostEstimate(flops=flops1, transcendentals=0,
                                      bytes_accessed=bytes1),
    )(patches_p, w_p)

    # ---------------- Finalize stats, fold BN into per-channel scale/shift ----------------
    inv_m = jnp.float32(1.0 / M)
    s = jnp.sum(s_part, axis=(0, 1))[:Cout]
    ss = jnp.sum(ss_part, axis=(0, 1))[:Cout]
    mean = s * inv_m
    var = jnp.maximum(ss * inv_m - mean * mean, 0.0)   # biased (train-mode) variance
    scale = gamma.astype(jnp.float32) * jax.lax.rsqrt(var + EPS)
    shift = beta.astype(jnp.float32) - mean * scale
    scale_row = scale.reshape(1, Cout)
    shift_row = shift.reshape(1, Cout)

    # ---------------- Pass 2: normalize + LeakyReLU ----------------
    flops2 = 3 * Mpad * Cout
    bytes2 = Mpad * Cout * 2 + 2 * Cout * 4 + Mpad * Cout * 4
    out_flat = pl.pallas_call(
        _norm_act_kernel,
        grid=(nmt,),
        out_shape=jax.ShapeDtypeStruct((Mpad, Cout), jnp.float32),
        in_specs=[
            pl.BlockSpec((TM, Cout), lambda i: (i, 0)),
            pl.BlockSpec((1, Cout), lambda i: (0, 0)),
            pl.BlockSpec((1, Cout), lambda i: (0, 0)),
        ],
        out_specs=pl.BlockSpec((TM, Cout), lambda i: (i, 0)),
        compiler_params=pltpu.CompilerParams(
            dimension_semantics=("parallel",)),
        cost_estimate=pl.CostEstimate(flops=flops2, transcendentals=0,
                                      bytes_accessed=bytes2),
    )(y_bf16, scale_row, shift_row)

    # Slice off M padding: (Mpad, Cout) -> (M, Cout) -> (N, Ho, Wo, Cout) -> NCHW.
    out = out_flat[:M, :].reshape(N, Ho, Wo, Cout)
    return jnp.transpose(out, (0, 3, 1, 2))


# --------------------------------------------------------------------------------------
# Pure-JAX f32 reference (same math) for verification
# --------------------------------------------------------------------------------------
def _reference(x_nchw, w_oihw, bias, gamma, beta):
    x_nhwc = jnp.transpose(x_nchw, (0, 2, 3, 1))
    x_pad = jnp.pad(x_nhwc, ((0, 0), (1, 1), (1, 1), (0, 0)), mode="edge")
    w_hwio = jnp.transpose(w_oihw, (2, 3, 1, 0))
    y = jax.lax.conv_general_dilated(
        x_pad, w_hwio, window_strides=(2, 2), padding="VALID",
        dimension_numbers=("NHWC", "HWIO", "NHWC"),
    ) + bias.reshape(1, 1, 1, -1)
    mean = jnp.mean(y, axis=(0, 1, 2), keepdims=True)
    var = jnp.mean(jnp.square(y - mean), axis=(0, 1, 2), keepdims=True)
    z = (y - mean) * jax.lax.rsqrt(var + EPS) * gamma.reshape(1, 1, 1, -1) \
        + beta.reshape(1, 1, 1, -1)
    z = jnp.where(z >= 0, z, NEG_SLOPE * z)
    return jnp.transpose(z, (0, 3, 1, 2))


if __name__ == "__main__":
    # Small shapes consistent with the module: N=2, Cin=4, H=W=16, Cout=8.
    key = jax.random.PRNGKey(0)
    kx, kw, kb, kg, kbe = jax.random.split(key, 5)

    N, Cin, H, W, Cout, Kh, Kw = 2, 4, 16, 16, 8, 4, 4
    x = jax.random.normal(kx, (N, Cin, H, W), dtype=jnp.float32)

    fan_in = Cin * Kh * Kw
    w = jax.random.uniform(kw, (Cout, Cin, Kh, Kw), jnp.float32,
                           minval=-1.0, maxval=1.0) / jnp.sqrt(fan_in)
    b = jax.random.uniform(kb, (Cout,), jnp.float32, minval=-0.1, maxval=0.1)
    gamma = 1.0 + 0.1 * jax.random.normal(kg, (Cout,), jnp.float32)
    beta = 0.1 * jax.random.normal(kbe, (Cout,), jnp.float32)

    fwd = jax.jit(vqvae_enc_block)
    out = fwd(x, w, b, gamma, beta)
    out = jax.block_until_ready(out)

    ref = _reference(x, w, b, gamma, beta)
    assert out.shape == (N, Cout, H // 2, W // 2), out.shape
    # bf16 matmul operands + bf16 conv intermediate -> looser tolerance vs f32 ref
    # (BN statistics themselves are accumulated in f32 and remain near-exact).
    assert jnp.allclose(out, ref, atol=5e-2, rtol=5e-2), \
        float(jnp.max(jnp.abs(out - ref)))

    print("KERNEL_OK")
</pallas_src>

<mosaic_0001>
module attributes {stable_mosaic.version = 11 : i64} {
  func.func @_conv_stats_kernel(%arg0: i32, %arg1: memref<128x128xbf16, #tpu.memory_space<vmem>>, %arg2: memref<128x128xbf16, #tpu.memory_space<vmem>>, %arg3: memref<128x8xbf16, #tpu.memory_space<vmem>>, %arg4: memref<1x1x128xf32, #tpu.memory_space<vmem>>, %arg5: memref<1x1x128xf32, #tpu.memory_space<vmem>>) attributes {dimension_semantics = [#tpu.dimension_semantics<parallel>], iteration_bounds = array<i64: 1>, scalar_prefetch = 0 : i64, scratch_operands = 0 : i64, tpu.core_type = #tpu.core_type<tc>, window_params = [{transform_indices = @transform_0, window_bounds = array<i64: 128, 128>}, {pipeline_mode = #tpu.pipeline_mode<synchronous>, transform_indices = @transform_1, window_bounds = array<i64: 128, 128>}, {transform_indices = @transform_2, window_bounds = array<i64: 128, 8>}, {transform_indices = @transform_3, window_bounds = array<i64: 1, 1, 128>}, {transform_indices = @transform_4, window_bounds = array<i64: 1, 1, 128>}]} {
    %c0 = arith.constant 0 : index
    %c0_0 = arith.constant 0 : index
    %0 = vector.load %arg1[%c0, %c0_0] : memref<128x128xbf16, #tpu.memory_space<vmem>>, vector<128x128xbf16>
    %c0_1 = arith.constant 0 : index
    %c0_2 = arith.constant 0 : index
    %1 = vector.load %arg2[%c0_1, %c0_2] : memref<128x128xbf16, #tpu.memory_space<vmem>>, vector<128x128xbf16>
    %cst = arith.constant dense<0.000000e+00> : vector<128x128xf32>
    %2 = tpu.matmul %0, %1, %cst {dimension_numbers = #tpu.dot_dimension_numbers<[1], [0], [0], [1], [0, 0, 1, 1], [], []>} : vector<128x128xbf16>, vector<128x128xbf16>, vector<128x128xf32> -> vector<128x128xf32>
    %cst_3 = arith.constant dense<0.000000e+00> : vector<128xf32>
    %3 = vector.multi_reduction <add>, %2, %cst_3 [0] : vector<128x128xf32> to vector<128xf32>
    %4 = vector.shape_cast %3 : vector<128xf32> to vector<1x128xf32>
    %5 = arith.mulf %2, %2 : vector<128x128xf32>
    %cst_4 = arith.constant dense<0.000000e+00> : vector<128xf32>
    %6 = vector.multi_reduction <add>, %5, %cst_4 [0] : vector<128x128xf32> to vector<128xf32>
    %7 = vector.shape_cast %6 : vector<128xf32> to vector<1x128xf32>
    %8 = vector.shape_cast %4 : vector<1x128xf32> to vector<1x1x128xf32>
    %c0_5 = arith.constant 0 : index
    %c0_6 = arith.constant 0 : index
    %c0_7 = arith.constant 0 : index
    %9 = vector.load %arg4[%c0_5, %c0_6, %c0_7] : memref<1x1x128xf32, #tpu.memory_space<vmem>>, vector<1x1x128xf32>
    tpu.vector_store %arg4[%c0_5, %c0_6, %c0_7], %8 {strides = array<i32>} : memref<1x1x128xf32, #tpu.memory_space<vmem>>, vector<1x1x128xf32>,
    %10 = vector.shape_cast %7 : vector<1x128xf32> to vector<1x1x128xf32>
    %c0_8 = arith.constant 0 : index
    %c0_9 = arith.constant 0 : index
    %c0_10 = arith.constant 0 : index
    %11 = vector.load %arg5[%c0_8, %c0_9, %c0_10] : memref<1x1x128xf32, #tpu.memory_space<vmem>>, vector<1x1x128xf32>
    tpu.vector_store %arg5[%c0_8, %c0_9, %c0_10], %10 {strides = array<i32>} : memref<1x1x128xf32, #tpu.memory_space<vmem>>, vector<1x1x128xf32>,
    %12 = vector.extract_strided_slice %2 {offsets = [0, 0], sizes = [128, 8], strides = [1, 1]} : vector<128x128xf32> to vector<128x8xf32>
    %13 = arith.truncf %12 : vector<128x8xf32> to vector<128x8xbf16>
    %c0_11 = arith.constant 0 : index
    %c0_12 = arith.constant 0 : index
    %14 = vector.load %arg3[%c0_11, %c0_12] : memref<128x8xbf16, #tpu.memory_space<vmem>>, vector<128x8xbf16>
    tpu.vector_store %arg3[%c0_11, %c0_12], %13 {strides = array<i32>} : memref<128x8xbf16, #tpu.memory_space<vmem>>, vector<128x8xbf16>,
    return
  }
  func.func @transform_0(%arg0: i32) -> (i32, i32) {
    %c0_i32 = arith.constant 0 : i32
    %c0_i32_0 = arith.constant 0 : i32
    return %arg0, %c0_i32 : i32, i32
  }
  func.func @transform_1(%arg0: i32) -> (i32, i32) {
    %c0_i32 = arith.constant 0 : i32
    %c0_i32_0 = arith.constant 0 : i32
    %c0_i32_1 = arith.constant 0 : i32
    return %c0_i32, %c0_i32_0 : i32, i32
  }
  func.func @transform_2(%arg0: i32) -> (i32, i32) {
    %c0_i32 = arith.constant 0 : i32
    %c0_i32_0 = arith.constant 0 : i32
    return %arg0, %c0_i32 : i32, i32
  }
  func.func @transform_3(%arg0: i32) -> (i32, i32, i32) {
    %c0_i32 = arith.constant 0 : i32
    %c0_i32_0 = arith.constant 0 : i32
    %c0_i32_1 = arith.constant 0 : i32
    return %arg0, %c0_i32, %c0_i32_0 : i32, i32, i32
  }
  func.func @transform_4(%arg0: i32) -> (i32, i32, i32) {
    %c0_i32 = arith.constant 0 : i32
    %c0_i32_0 = arith.constant 0 : i32
    %c0_i32_1 = arith.constant 0 : i32
    return %arg0, %c0_i32, %c0_i32_0 : i32, i32, i32
  }
}

module attributes {stable_mosaic.version = 11 : i64} {
  func.func @_norm_act_kernel(%arg0: i32, %arg1: memref<128x8xbf16, #tpu.memory_space<vmem>>, %arg2: memref<1x8xf32, #tpu.memory_space<vmem>>, %arg3: memref<1x8xf32, #tpu.memory_space<vmem>>, %arg4: memref<128x8xf32, #tpu.memory_space<vmem>>) attributes {dimension_semantics = [#tpu.dimension_semantics<parallel>], iteration_bounds = array<i64: 1>, scalar_prefetch = 0 : i64, scratch_operands = 0 : i64, tpu.core_type = #tpu.core_type<tc>, window_params = [{transform_indices = @transform_0, window_bounds = array<i64: 128, 8>}, {pipeline_mode = #tpu.pipeline_mode<synchronous>, transform_indices = @transform_1, window_bounds = array<i64: 1, 8>}, {pipeline_mode = #tpu.pipeline_mode<synchronous>, transform_indices = @transform_2, window_bounds = array<i64: 1, 8>}, {transform_indices = @transform_3, window_bounds = array<i64: 128, 8>}]} {
    %c0 = arith.constant 0 : index
    %c0_0 = arith.constant 0 : index
    %0 = vector.load %arg1[%c0, %c0_0] : memref<128x8xbf16, #tpu.memory_space<vmem>>, vector<128x8xbf16>
    %1 = arith.extf %0 : vector<128x8xbf16> to vector<128x8xf32>
    %c0_1 = arith.constant 0 : index
    %c0_2 = arith.constant 0 : index
    %2 = vector.load %arg2[%c0_1, %c0_2] : memref<1x8xf32, #tpu.memory_space<vmem>>, vector<1x8xf32>
    %3 = vector.broadcast %2 : vector<1x8xf32> to vector<128x8xf32>
    %4 = arith.mulf %1, %3 : vector<128x8xf32>
    %c0_3 = arith.constant 0 : index
    %c0_4 = arith.constant 0 : index
    %5 = vector.load %arg3[%c0_3, %c0_4] : memref<1x8xf32, #tpu.memory_space<vmem>>, vector<1x8xf32>
    %6 = vector.broadcast %5 : vector<1x8xf32> to vector<128x8xf32>
    %7 = arith.addf %4, %6 : vector<128x8xf32>
    %cst = arith.constant 0.000000e+00 : f32
    %8 = vector.broadcast %cst : f32 to vector<128x8xf32>
    %9 = arith.cmpf oge, %7, %8 : vector<128x8xf32>
    %cst_5 = arith.constant 0.00999999977 : f32
    %10 = vector.broadcast %cst_5 : f32 to vector<128x8xf32>
    %11 = arith.mulf %10, %7 : vector<128x8xf32>
    %12 = arith.select %9, %7, %11 : vector<128x8xi1>, vector<128x8xf32>
    %c0_6 = arith.constant 0 : index
    %c0_7 = arith.constant 0 : index
    %13 = vector.load %arg4[%c0_6, %c0_7] : memref<128x8xf32, #tpu.memory_space<vmem>>, vector<128x8xf32>
    tpu.vector_store %arg4[%c0_6, %c0_7], %12 {strides = array<i32>} : memref<128x8xf32, #tpu.memory_space<vmem>>, vector<128x8xf32>,
    return
  }
  func.func @transform_0(%arg0: i32) -> (i32, i32) {
    %c0_i32 = arith.constant 0 : i32
    %c0_i32_0 = arith.constant 0 : i32
    return %arg0, %c0_i32 : i32, i32
  }
  func.func @transform_1(%arg0: i32) -> (i32, i32) {
    %c0_i32 = arith.constant 0 : i32
    %c0_i32_0 = arith.constant 0 : i32
    %c0_i32_1 = arith.constant 0 : i32
    return %c0_i32, %c0_i32_0 : i32, i32
  }
  func.func @transform_2(%arg0: i32) -> (i32, i32) {
    %c0_i32 = arith.constant 0 : i32
    %c0_i32_0 = arith.constant 0 : i32
    %c0_i32_1 = arith.constant 0 : i32
    return %c0_i32, %c0_i32_0 : i32, i32
  }
  func.func @transform_3(%arg0: i32) -> (i32, i32) {
    %c0_i32 = arith.constant 0 : i32
    %c0_i32_0 = arith.constant 0 : i32
    return %arg0, %c0_i32 : i32, i32
  }
}

</mosaic_0001>

<llo_original>
// kernel: vqvae_enc_block.3
$region0: #{vqvae_enc_block.3}
  #allocation0 [shape = 'u32[]', space=smem, size = 0x4, offset = 0x4, fixed_abs, tag = 'smem constant byte address 0x4 - core index']
  #allocation1 [shape = 'u32[144,128]{1,0:T(1,128)}', space=vmem, size = 0x12000, scoped, tag = 'internal scratch']
  %s0 = inlined_call_operand.vmem [shape: bf16[128,8], index: 0, kind: input, shape index: {}]
  %s1 = inlined_call_operand.vmem [shape: f32[1,8], index: 1, kind: input, shape index: {}]
  %s2 = inlined_call_operand.vmem [shape: f32[1,8], index: 2, kind: input, shape index: {}]
  %s3 = inlined_call_operand.vmem [shape: f32[128,8], index: 3, kind: output, shape index: {}]
  %s4 = sld [smem:[#allocation0]]
  $region22: #{vqvae_enc_block.3} parent=0
    _
  %s6 = ssub.s32 1, %s4
  %s7 = scalar_select 0, %s6, %s4
  // Predicated region
  $region2: #{vqvae_enc_block.3} parent=0 // pred_check
    _
  $region3: #{vqvae_enc_block.3} parent=0 // pred_check_branch
    %9 = sbr.rel (0) target = $region5
  $region4: #{vqvae_enc_block.3} parent=0 // pred_region
    _
  $region5: #{vqvae_enc_block.3} parent=0 // pred_fallthru
    _
  // Predicated region
  $region6: #{vqvae_enc_block.3} parent=0 // pred_check
    _
  $region7: #{vqvae_enc_block.3} parent=0 // pred_check_branch
    %11 = sbr.rel (0) target = $region9
  $region8: #{vqvae_enc_block.3} parent=0 // pred_region
    _
  $region9: #{vqvae_enc_block.3} parent=0 // pred_fallthru
    _
  // Predicated region
  $region10: #{vqvae_enc_block.3} parent=0 // pred_check
    _
  $region11: #{vqvae_enc_block.3} parent=0 // pred_check_branch
    %13 = sbr.rel (0) target = $region13
  $region12: #{vqvae_enc_block.3} parent=0 // pred_region
    _
  $region13: #{vqvae_enc_block.3} parent=0 // pred_fallthru
    _
  %v14 = vld [vmem:[%s0] sm:$0xf]
  %v15 = vld [vmem:[%s0 + $0x4] sm:$0xf]
  %v16 = vld [vmem:[%s0 + $0x8] sm:$0xf]
  %v17 = vld [vmem:[%s0 + $0xc] sm:$0xf]
  %v18 = vld [vmem:[%s0 + $0x10] sm:$0xf]
  %v19 = vld [vmem:[%s0 + $0x14] sm:$0xf]
  %v20 = vld [vmem:[%s0 + $0x18] sm:$0xf]
  %v21 = vld [vmem:[%s0 + $0x1c] sm:$0xf]
  %v22 = vld [vmem:[%s0 + $0x20] sm:$0xf]
  %v23 = vld [vmem:[%s0 + $0x24] sm:$0xf]
  %v24 = vld [vmem:[%s0 + $0x28] sm:$0xf]
  %v25 = vld [vmem:[%s0 + $0x2c] sm:$0xf]
  %v26 = vld [vmem:[%s0 + $0x30] sm:$0xf]
  %v27 = vld [vmem:[%s0 + $0x34] sm:$0xf]
  %v28 = vld [vmem:[%s0 + $0x38] sm:$0xf]
  %v29 = vld [vmem:[%s0 + $0x3c] sm:$0xf]
  %v30 = vunpack.c.l.bf16 %v14
  %v31 = vunpack.c.l.bf16 %v15
  %v32 = vunpack.c.l.bf16 %v16
  %v33 = vunpack.c.l.bf16 %v17
  %v34 = vunpack.c.l.bf16 %v18
  %v35 = vunpack.c.l.bf16 %v19
  %v36 = vunpack.c.l.bf16 %v20
  %v37 = vunpack.c.l.bf16 %v21
  %v38 = vunpack.c.l.bf16 %v22
  %v39 = vunpack.c.l.bf16 %v23
  %v40 = vunpack.c.l.bf16 %v24
  %v41 = vunpack.c.l.bf16 %v25
  %v42 = vunpack.c.l.bf16 %v26
  %v43 = vunpack.c.l.bf16 %v27
  %v44 = vunpack.c.l.bf16 %v28
  %v45 = vunpack.c.l.bf16 %v29
  %v46 = vld [vmem:[%s1] sm:$0x1]
  %v48 = vlaneseq
  %v49 = vshrl.u32 %v48, 7
  %v50 = vsub.s32 0, %v49
  %v51 = vrot.slane %v46, %v50
  %v53 = vmul.f32 %v30, %v51
  %v54 = vmul.f32 %v31, %v51
  %v55 = vmul.f32 %v32, %v51
  %v56 = vmul.f32 %v33, %v51
  %v57 = vmul.f32 %v34, %v51
  %v58 = vmul.f32 %v35, %v51
  %v59 = vmul.f32 %v36, %v51
  %v60 = vmul.f32 %v37, %v51
  %v61 = vmul.f32 %v38, %v51
  %v62 = vmul.f32 %v39, %v51
  %v63 = vmul.f32 %v40, %v51
  %v64 = vmul.f32 %v41, %v51
  %v65 = vmul.f32 %v42, %v51
  %v66 = vmul.f32 %v43, %v51
  %v67 = vmul.f32 %v44, %v51
  %v68 = vmul.f32 %v45, %v51
  %v69 = vld [vmem:[%s2] sm:$0x1]
  %v71 = vlaneseq
  %v72 = vshrl.u32 %v71, 7
  %v73 = vsub.s32 0, %v72
  %v74 = vrot.slane %v69, %v73
  %v76 = vadd.f32 %v53, %v74
  %v77 = vadd.f32 %v54, %v74
  %v78 = vadd.f32 %v55, %v74
  %v79 = vadd.f32 %v56, %v74
  %v80 = vadd.f32 %v57, %v74
  %v81 = vadd.f32 %v58, %v74
  %v82 = vadd.f32 %v59, %v74
  %v83 = vadd.f32 %v60, %v74
  %v84 = vadd.f32 %v61, %v74
  %v85 = vadd.f32 %v62, %v74
  %v86 = vadd.f32 %v63, %v74
  %v87 = vadd.f32 %v64, %v74
  %v88 = vadd.f32 %v65, %v74
  %v89 = vadd.f32 %v66, %v74
  %v90 = vadd.f32 %v67, %v74
  %v91 = vadd.f32 %v68, %v74
  %vm92 = vcmp.ge.f32.partialorder %v76, 0.0
  %vm93 = vcmp.ge.f32.partialorder %v77, 0.0
  %vm94 = vcmp.ge.f32.partialorder %v78, 0.0
  %vm95 = vcmp.ge.f32.partialorder %v79, 0.0
  %vm96 = vcmp.ge.f32.partialorder %v80, 0.0
  %vm97 = vcmp.ge.f32.partialorder %v81, 0.0
  %vm98 = vcmp.ge.f32.partialorder %v82, 0.0
  %vm99 = vcmp.ge.f32.partialorder %v83, 0.0
  %vm100 = vcmp.ge.f32.partialorder %v84, 0.0
  %vm101 = vcmp.ge.f32.partialorder %v85, 0.0
  %vm102 = vcmp.ge.f32.partialorder %v86, 0.0
  %vm103 = vcmp.ge.f32.partialorder %v87, 0.0
  %vm104 = vcmp.ge.f32.partialorder %v88, 0.0
  %vm105 = vcmp.ge.f32.partialorder %v89, 0.0
  %vm106 = vcmp.ge.f32.partialorder %v90, 0.0
  %vm107 = vcmp.ge.f32.partialorder %v91, 0.0
  %v108 = vmul.f32 %v76, 0.01
  %v109 = vmul.f32 %v77, 0.01
  %v110 = vmul.f32 %v78, 0.01
  %v111 = vmul.f32 %v79, 0.01
  %v112 = vmul.f32 %v80, 0.01
  %v113 = vmul.f32 %v81, 0.01
  %v114 = vmul.f32 %v82, 0.01
  %v115 = vmul.f32 %v83, 0.01
  %v116 = vmul.f32 %v84, 0.01
  %v117 = vmul.f32 %v85, 0.01
  %v118 = vmul.f32 %v86, 0.01
  %v119 = vmul.f32 %v87, 0.01
  %v120 = vmul.f32 %v88, 0.01
  %v121 = vmul.f32 %v89, 0.01
  %v122 = vmul.f32 %v90, 0.01
  %v123 = vmul.f32 %v91, 0.01
  %v124 = vsel %vm92, %v76, %v108
  %v125 = vsel %vm93, %v77, %v109
  %v126 = vsel %vm94, %v78, %v110
  %v127 = vsel %vm95, %v79, %v111
  %v128 = vsel %vm96, %v80, %v112
  %v129 = vsel %vm97, %v81, %v113
  %v130 = vsel %vm98, %v82, %v114
  %v131 = vsel %vm99, %v83, %v115
  %v132 = vsel %vm100, %v84, %v116
  %v133 = vsel %vm101, %v85, %v117
  %v134 = vsel %vm102, %v86, %v118
  %v135 = vsel %vm103, %v87, %v119
  %v136 = vsel %vm104, %v88, %v120
  %v137 = vsel %vm105, %v89, %v121
  %v138 = vsel %vm106, %v90, %v122
  %v139 = vsel %vm107, %v91, %v123
  %vm140 = vcmask 64512
  %141 = vst.msk [vmem:[%s3] sm:$0xff] %vm140, %v124
  %142 = vst.msk [vmem:[%s3 + $0x8] sm:$0xff] %vm140, %v125
  %143 = vst.msk [vmem:[%s3 + $0x10] sm:$0xff] %vm140, %v126
  %144 = vst.msk [vmem:[%s3 + $0x18] sm:$0xff] %vm140, %v127
  %145 = vst.msk [vmem:[%s3 + $0x20] sm:$0xff] %vm140, %v128
  %146 = vst.msk [vmem:[%s3 + $0x28] sm:$0xff] %vm140, %v129
  %147 = vst.msk [vmem:[%s3 + $0x30] sm:$0xff] %vm140, %v130
  %148 = vst.msk [vmem:[%s3 + $0x38] sm:$0xff] %vm140, %v131
  %149 = vst.msk [vmem:[%s3 + $0x40] sm:$0xff] %vm140, %v132
  %150 = vst.msk [vmem:[%s3 + $0x48] sm:$0xff] %vm140, %v133
  %151 = vst.msk [vmem:[%s3 + $0x50] sm:$0xff] %vm140, %v134
  %152 = vst.msk [vmem:[%s3 + $0x58] sm:$0xff] %vm140, %v135
  %153 = vst.msk [vmem:[%s3 + $0x60] sm:$0xff] %vm140, %v136
  %154 = vst.msk [vmem:[%s3 + $0x68] sm:$0xff] %vm140, %v137
  %155 = vst.msk [vmem:[%s3 + $0x70] sm:$0xff] %vm140, %v138
  %156 = vst.msk [vmem:[%s3 + $0x78] sm:$0xff] %vm140, %v139
  // Predicated region
  $region14: #{vqvae_enc_block.3} parent=0 // pred_check
    _
  $region15: #{vqvae_enc_block.3} parent=0 // pred_check_branch
    %158 = sbr.rel (0) target = $region17
  $region16: #{vqvae_enc_block.3} parent=0 // pred_region
    _
  $region17: #{vqvae_enc_block.3} parent=0 // pred_fallthru
    _
  // Predicated region
  $region18: #{vqvae_enc_block.3} parent=0 // pred_check
    _
  $region19: #{vqvae_enc_block.3} parent=0 // pred_check_branch
    %160 = sbr.rel (0) target = $region21
  $region20: #{vqvae_enc_block.3} parent=0 // pred_region
    _
  $region21: #{vqvae_enc_block.3} parent=0 // pred_fallthru
    _

// kernel: vqvae_enc_block.2
$region0: #{vqvae_enc_block.2}
  #allocation0 [shape = 'u32[]', space=smem, size = 0x4, offset = 0x4, fixed_abs, tag = 'smem constant byte address 0x4 - core index']
  #allocation1 [shape = 'u32[144,128]{1,0:T(1,128)}', space=vmem, size = 0x12000, scoped, tag = 'internal scratch']
  %s0 = inlined_call_operand.vmem [shape: bf16[128,128], index: 0, kind: input, shape index: {}]
  %s1 = inlined_call_operand.vmem [shape: bf16[128,128], index: 1, kind: input, shape index: {}]
  %s2 = inlined_call_operand.vmem [shape: bf16[128,8], index: 2, kind: output, shape index: {0}]
  %s3 = inlined_call_operand.vmem [shape: f32[1,1,128], index: 3, kind: output, shape index: {1}]
  %s4 = inlined_call_operand.vmem [shape: f32[1,1,128], index: 4, kind: output, shape index: {2}]
  %5 = xla_tuple %s2, %s3, %s4
  %s6 = sld [smem:[#allocation0]]
  $region34: #{vqvae_enc_block.2} parent=0
    _
  %s8 = ssub.s32 1, %s6
  %s9 = scalar_select 0, %s8, %s6
  // Predicated region
  $region2: #{vqvae_enc_block.2} parent=0 // pred_check
    _
  $region3: #{vqvae_enc_block.2} parent=0 // pred_check_branch
    %11 = sbr.rel (0) target = $region5
  $region4: #{vqvae_enc_block.2} parent=0 // pred_region
    _
  $region5: #{vqvae_enc_block.2} parent=0 // pred_fallthru
    _
  // Predicated region
  $region6: #{vqvae_enc_block.2} parent=0 // pred_check
    _
  $region7: #{vqvae_enc_block.2} parent=0 // pred_check_branch
    %13 = sbr.rel (0) target = $region9
  $region8: #{vqvae_enc_block.2} parent=0 // pred_region
    _
  $region9: #{vqvae_enc_block.2} parent=0 // pred_fallthru
    _
  %v15 = vld [vmem:[%s0] sm:$0xf]
  %v16 = vld [vmem:[%s0 + $0x4] sm:$0xf]
  %v17 = vld [vmem:[%s0 + $0x8] sm:$0xf]
  %v18 = vld [vmem:[%s0 + $0xc] sm:$0xf]
  %v19 = vld [vmem:[%s0 + $0x10] sm:$0xf]
  %v20 = vld [vmem:[%s0 + $0x14] sm:$0xf]
  %v21 = vld [vmem:[%s0 + $0x18] sm:$0xf]
  %v22 = vld [vmem:[%s0 + $0x1c] sm:$0xf]
  %v23 = vld [vmem:[%s0 + $0x20] sm:$0xf]
  %v24 = vld [vmem:[%s0 + $0x24] sm:$0xf]
  %v25 = vld [vmem:[%s0 + $0x28] sm:$0xf]
  %v26 = vld [vmem:[%s0 + $0x2c] sm:$0xf]
  %v27 = vld [vmem:[%s0 + $0x30] sm:$0xf]
  %v28 = vld [vmem:[%s0 + $0x34] sm:$0xf]
  %v29 = vld [vmem:[%s0 + $0x38] sm:$0xf]
  %v30 = vld [vmem:[%s0 + $0x3c] sm:$0xf]
  %v31 = vld [vmem:[%s1] sm:$0xf]
  %v32 = vld [vmem:[%s1 + $0x4] sm:$0xf]
  %v33 = vld [vmem:[%s1 + $0x8] sm:$0xf]
  %v34 = vld [vmem:[%s1 + $0xc] sm:$0xf]
  %v35 = vld [vmem:[%s1 + $0x10] sm:$0xf]
  %v36 = vld [vmem:[%s1 + $0x14] sm:$0xf]
  %v37 = vld [vmem:[%s1 + $0x18] sm:$0xf]
  %v38 = vld [vmem:[%s1 + $0x1c] sm:$0xf]
  %v39 = vld [vmem:[%s1 + $0x20] sm:$0xf]
  %v40 = vld [vmem:[%s1 + $0x24] sm:$0xf]
  %v41 = vld [vmem:[%s1 + $0x28] sm:$0xf]
  %v42 = vld [vmem:[%s1 + $0x2c] sm:$0xf]
  %v43 = vld [vmem:[%s1 + $0x30] sm:$0xf]
  %v44 = vld [vmem:[%s1 + $0x34] sm:$0xf]
  %v45 = vld [vmem:[%s1 + $0x38] sm:$0xf]
  %v46 = vld [vmem:[%s1 + $0x3c] sm:$0xf]
  %v63 = vunpack.c.l.b16 %v15
  %v64 = vunpack.c.l.b16 %v16
  %v65 = vunpack.c.l.b16 %v17
  %v66 = vunpack.c.l.b16 %v18
  %v67 = vunpack.c.l.b16 %v19
  %v68 = vunpack.c.l.b16 %v20
  %v69 = vunpack.c.l.b16 %v21
  %v70 = vunpack.c.l.b16 %v22
  %v71 = vunpack.c.l.b16 %v23
  %v72 = vunpack.c.l.b16 %v24
  %v73 = vunpack.c.l.b16 %v25
  %v74 = vunpack.c.l.b16 %v26
  %v75 = vunpack.c.l.b16 %v27
  %v76 = vunpack.c.l.b16 %v28
  %v77 = vunpack.c.l.b16 %v29
  %v78 = vunpack.c.l.b16 %v30
  %v79 = vpack.c.b16 %v64, %v63
  %v80 = vpack.c.b16 %v66, %v65
  %v81 = vpack.c.b16 %v68, %v67
  %v82 = vpack.c.b16 %v70, %v69
  %v83 = vpack.c.b16 %v72, %v71
  %v84 = vpack.c.b16 %v74, %v73
  %v85 = vpack.c.b16 %v76, %v75
  %v86 = vpack.c.b16 %v78, %v77
  %v111 = vunpack.c.l.b16 %v31
  %v112 = vunpack.c.l.b16 %v32
  %v113 = vunpack.c.l.b16 %v33
  %v114 = vunpack.c.l.b16 %v34
  %v115 = vunpack.c.l.b16 %v35
  %v116 = vunpack.c.l.b16 %v36
  %v117 = vunpack.c.l.b16 %v37
  %v118 = vunpack.c.l.b16 %v38
  %v119 = vunpack.c.l.b16 %v39
  %v120 = vunpack.c.l.b16 %v40
  %v121 = vunpack.c.l.b16 %v41
  %v122 = vunpack.c.l.b16 %v42
  %v123 = vunpack.c.l.b16 %v43
  %v124 = vunpack.c.l.b16 %v44
  %v125 = vunpack.c.l.b16 %v45
  %v126 = vunpack.c.l.b16 %v46
  %v127 = vpack.c.b16 %v112, %v111
  %v128 = vpack.c.b16 %v114, %v113
  %v129 = vpack.c.b16 %v116, %v115
  %v130 = vpack.c.b16 %v118, %v117
  %v131 = vpack.c.b16 %v120, %v119
  %v132 = vpack.c.b16 %v122, %v121
  %v133 = vpack.c.b16 %v124, %v123
  %v134 = vpack.c.b16 %v126, %v125
  %143 = vmatprep.subr.bf16.mxu0 0
  %144 = vmatpush1.bf16.msra.mxu0 %v134
  %145 = vmatprep.subr.bf16.mxu0 0
  %146 = vmatpush1.bf16.msra.mxu0 %v133
  %147 = vmatprep.subr.bf16.mxu0 0
  %148 = vmatpush1.bf16.msra.mxu0 %v132
  %149 = vmatprep.subr.bf16.mxu0 0
  %150 = vmatpush1.bf16.msra.mxu0 %v131
  %151 = vmatprep.subr.bf16.mxu0 0
  %152 = vmatpush1.bf16.msra.mxu0 %v130
  %153 = vmatprep.subr.bf16.mxu0 0
  %154 = vmatpush1.bf16.msra.mxu0 %v129
  %155 = vmatprep.subr.bf16.mxu0 0
  %156 = vmatpush1.bf16.msra.mxu0 %v128
  %157 = vmatprep.subr.bf16.mxu0 0
  %158 = vmatpush1.bf16.msra.mxu0 %v127
  %159 = vmatprep.subr.bf16.mxu0 0
  %160 = vmatpush2.bf16.msra.mxu0 0
  %161 = vmatprep.subr.bf16.mxu0 0
  %162 = vmatpush2.bf16.msra.mxu0 0
  %163 = vmatprep.subr.bf16.mxu0 0
  %164 = vmatpush2.bf16.msra.mxu0 0
  %165 = vmatprep.subr.bf16.mxu0 0
  %166 = vmatpush2.bf16.msra.mxu0 0
  %167 = vmatprep.subr.bf16.mxu0 0
  %168 = vmatpush2.bf16.msra.mxu0 0
  %169 = vmatprep.subr.bf16.mxu0 0
  %170 = vmatpush2.bf16.msra.mxu0 0
  %171 = vmatprep.subr.bf16.mxu0 0
  %172 = vmatpush2.bf16.msra.mxu0 0
  %173 = vmatprep.subr.bf16.mxu0 0
  %174 = vmatpush2.bf16.msra.mxu0 0
  %175 = vmatprep.mubr.bf16.mxu0 0
  %176 = vmatmul.mubr.bf16.gmra.mxu0 %v79
  %v177 = vpop.f32.mrf.mxu0
  %v178 = vadd.f32 0.0, %v177
  %v179 = vpop.f32.mrf.mxu0
  %v180 = vpop.f32.mrf.mxu0
  %v181 = vadd.f32 0.0, %v180
  %v182 = vpop.f32.mrf.mxu0
  %183 = vmatprep.mubr.bf16.mxu0 0
  %184 = vmatmul.mubr.bf16.gmra.mxu0 %v80
  %v185 = vpop.f32.mrf.mxu0
  %v186 = vadd.f32 0.0, %v185
  %v187 = vpop.f32.mrf.mxu0
  %v188 = vpop.f32.mrf.mxu0
  %v189 = vadd.f32 0.0, %v188
  %v190 = vpop.f32.mrf.mxu0
  %191 = vmatprep.mubr.bf16.mxu0 0
  %192 = vmatmul.mubr.bf16.gmra.mxu0 %v81
  %v193 = vpop.f32.mrf.mxu0
  %v194 = vadd.f32 0.0, %v193
  %v195 = vpop.f32.mrf.mxu0
  %v196 = vpop.f32.mrf.mxu0
  %v197 = vadd.f32 0.0, %v196
  %v198 = vpop.f32.mrf.mxu0
  %199 = vmatprep.mubr.bf16.mxu0 0
  %200 = vmatmul.mubr.bf16.gmra.mxu0 %v82
  %v201 = vpop.f32.mrf.mxu0
  %v202 = vadd.f32 0.0, %v201
  %v203 = vpop.f32.mrf.mxu0
  %v204 = vpop.f32.mrf.mxu0
  %v205 = vadd.f32 0.0, %v204
  %v206 = vpop.f32.mrf.mxu0
  %207 = vmatprep.mubr.bf16.mxu0 0
  %208 = vmatmul.mubr.bf16.gmra.mxu0 %v83
  %v209 = vpop.f32.mrf.mxu0
  %v210 = vadd.f32 0.0, %v209
  %v211 = vpop.f32.mrf.mxu0
  %v212 = vpop.f32.mrf.mxu0
  %v213 = vadd.f32 0.0, %v212
  %v214 = vpop.f32.mrf.mxu0
  %215 = vmatprep.mubr.bf16.mxu0 0
  %216 = vmatmul.mubr.bf16.gmra.mxu0 %v84
  %v217 = vpop.f32.mrf.mxu0
  %v218 = vadd.f32 0.0, %v217
  %v219 = vpop.f32.mrf.mxu0
  %v220 = vpop.f32.mrf.mxu0
  %v221 = vadd.f32 0.0, %v220
  %v222 = vpop.f32.mrf.mxu0
  %223 = vmatprep.mubr.bf16.mxu0 0
  %224 = vmatmul.mubr.bf16.gmra.mxu0 %v85
  %v225 = vpop.f32.mrf.mxu0
  %v226 = vadd.f32 0.0, %v225
  %v227 = vpop.f32.mrf.mxu0
  %v228 = vpop.f32.mrf.mxu0
  %v229 = vadd.f32 0.0, %v228
  %v230 = vpop.f32.mrf.mxu0
  %231 = vmatprep.mubr.bf16.mxu0 0
  %232 = vmatmul.mubr.bf16.gmra.mxu0 %v86
  %v233 = vpop.f32.mrf.mxu0
  %v234 = vadd.f32 0.0, %v233
  %v235 = vpop.f32.mrf.mxu0
  %v236 = vpop.f32.mrf.mxu0
  %v237 = vadd.f32 0.0, %v236
  %v238 = vpop.f32.mrf.mxu0
  %239 = vdwg.mxu0
  %v240 = vadd.f32 %v178, %v181
  %v241 = vadd.f32 %v240, %v186
  %v242 = vadd.f32 %v241, %v189
  %v243 = vadd.f32 %v242, %v194
  %v244 = vadd.f32 %v243, %v197
  %v245 = vadd.f32 %v244, %v202
  %v246 = vadd.f32 %v245, %v205
  %v247 = vadd.f32 %v246, %v210
  %v248 = vadd.f32 %v247, %v213
  %v249 = vadd.f32 %v248, %v218
  %v250 = vadd.f32 %v249, %v221
  %v251 = vadd.f32 %v250, %v226
  %v252 = vadd.f32 %v251, %v229
  %v253 = vadd.f32 %v252, %v234
  %v254 = vadd.f32 %v253, %v237
  %v255 = vrot.slane %v254, 4
  %v256 = vadd.f32 %v254, %v255
  %v257 = vrot.slane %v256, 2
  %v258 = vadd.f32 %v256, %v257
  %v259 = vrot.slane %v258, 1
  %v260 = vadd.f32 %v258, %v259
  %v261 = vmul.f32 %v178, %v178
  %v262 = vmul.f32 %v181, %v181
  %v263 = vmul.f32 %v186, %v186
  %v264 = vmul.f32 %v189, %v189
  %v265 = vmul.f32 %v194, %v194
  %v266 = vmul.f32 %v197, %v197
  %v267 = vmul.f32 %v202, %v202
  %v268 = vmul.f32 %v205, %v205
  %v269 = vmul.f32 %v210, %v210
  %v270 = vmul.f32 %v213, %v213
  %v271 = vmul.f32 %v218, %v218
  %v272 = vmul.f32 %v221, %v221
  %v273 = vmul.f32 %v226, %v226
  %v274 = vmul.f32 %v229, %v229
  %v275 = vmul.f32 %v234, %v234
  %v276 = vmul.f32 %v237, %v237
  %v277 = vadd.f32 %v261, %v262
  %v278 = vadd.f32 %v277, %v263
  %v279 = vadd.f32 %v278, %v264
  %v280 = vadd.f32 %v279, %v265
  %v281 = vadd.f32 %v280, %v266
  %v282 = vadd.f32 %v281, %v267
  %v283 = vadd.f32 %v282, %v268
  %v284 = vadd.f32 %v283, %v269
  %v285 = vadd.f32 %v284, %v270
  %v286 = vadd.f32 %v285, %v271
  %v287 = vadd.f32 %v286, %v272
  %v288 = vadd.f32 %v287, %v273
  %v289 = vadd.f32 %v288, %v274
  %v290 = vadd.f32 %v289, %v275
  %v291 = vadd.f32 %v290, %v276
  %v292 = vrot.slane %v291, 4
  %v293 = vadd.f32 %v291, %v292
  %v294 = vrot.slane %v293, 2
  %v295 = vadd.f32 %v293, %v294
  %v296 = vrot.slane %v295, 1
  %v297 = vadd.f32 %v295, %v296
  %298 = vst [vmem:[%s3] sm:$0x1] %v260
  %299 = vst [vmem:[%s4] sm:$0x1] %v297
  %v300 = vpack.c.bf16 %v181, %v178
  %v301 = vpack.c.bf16 %v189, %v186
  %v302 = vpack.c.bf16 %v197, %v194
  %v303 = vpack.c.bf16 %v205, %v202
  %v304 = vpack.c.bf16 %v213, %v210
  %v305 = vpack.c.bf16 %v221, %v218
  %v306 = vpack.c.bf16 %v229, %v226
  %v307 = vpack.c.bf16 %v237, %v234
  %v316 = vunpack.c.l.b16 %v300
  %v317 = vunpack.c.h.b16 %v300
  %v318 = vunpack.c.l.b16 %v301
  %v319 = vunpack.c.h.b16 %v301
  %v320 = vunpack.c.l.b16 %v302
  %v321 = vunpack.c.h.b16 %v302
  %v322 = vunpack.c.l.b16 %v303
  %v323 = vunpack.c.h.b16 %v303
  %v324 = vunpack.c.l.b16 %v304
  %v325 = vunpack.c.h.b16 %v304
  %v326 = vunpack.c.l.b16 %v305
  %v327 = vunpack.c.h.b16 %v305
  %v328 = vunpack.c.l.b16 %v306
  %v329 = vunpack.c.h.b16 %v306
  %v330 = vunpack.c.l.b16 %v307
  %v331 = vunpack.c.h.b16 %v307
  %v332 = vpack.c.b16 %v316, %v316
  %v333 = vpack.c.b16 %v317, %v317
  %v334 = vpack.c.b16 %v318, %v318
  %v335 = vpack.c.b16 %v319, %v319
  %v336 = vpack.c.b16 %v320, %v320
  %v337 = vpack.c.b16 %v321, %v321
  %v338 = vpack.c.b16 %v322, %v322
  %v339 = vpack.c.b16 %v323, %v323
  %v340 = vpack.c.b16 %v324, %v324
  %v341 = vpack.c.b16 %v325, %v325
  %v342 = vpack.c.b16 %v326, %v326
  %v343 = vpack.c.b16 %v327, %v327
  %v344 = vpack.c.b16 %v328, %v328
  %v345 = vpack.c.b16 %v329, %v329
  %v346 = vpack.c.b16 %v330, %v330
  %v347 = vpack.c.b16 %v331, %v331
  %vm364 = vcmask 60416
  %365 = vst.msk [vmem:[%s2] sm:$0xf] %vm364, %v332
  %366 = vst.msk [vmem:[%s2 + $0x4] sm:$0xf] %vm364, %v333
  %367 = vst.msk [vmem:[%s2 + $0x8] sm:$0xf] %vm364, %v334
  %368 = vst.msk [vmem:[%s2 + $0xc] sm:$0xf] %vm364, %v335
  %369 = vst.msk [vmem:[%s2 + $0x10] sm:$0xf] %vm364, %v336
  %370 = vst.msk [vmem:[%s2 + $0x14] sm:$0xf] %vm364, %v337
  %371 = vst.msk [vmem:[%s2 + $0x18] sm:$0xf] %vm364, %v338
  %372 = vst.msk [vmem:[%s2 + $0x1c] sm:$0xf] %vm364, %v339
  %373 = vst.msk [vmem:[%s2 + $0x20] sm:$0xf] %vm364, %v340
  %374 = vst.msk [vmem:[%s2 + $0x24] sm:$0xf] %vm364, %v341
  %375 = vst.msk [vmem:[%s2 + $0x28] sm:$0xf] %vm364, %v342
  %376 = vst.msk [vmem:[%s2 + $0x2c] sm:$0xf] %vm364, %v343
  %377 = vst.msk [vmem:[%s2 + $0x30] sm:$0xf] %vm364, %v344
  %378 = vst.msk [vmem:[%s2 + $0x34] sm:$0xf] %vm364, %v345
  %379 = vst.msk [vmem:[%s2 + $0x38] sm:$0xf] %vm364, %v346
  %380 = vst.msk [vmem:[%s2 + $0x3c] sm:$0xf] %vm364, %v347
  // Predicated region
  $region10: #{vqvae_enc_block.2} parent=0 // pred_check
    _
  $region11: #{vqvae_enc_block.2} parent=0 // pred_check_branch
    %382 = sbr.rel (0) target = $region13
  $region12: #{vqvae_enc_block.2} parent=0 // pred_region
    _
  $region13: #{vqvae_enc_block.2} parent=0 // pred_fallthru
    _
  // Predicated region
  $region14: #{vqvae_enc_block.2} parent=0 // pred_check
    _
  $region15: #{vqvae_enc_block.2} parent=0 // pred_check_branch
    %384 = sbr.rel (0) target = $region17
  $region16: #{vqvae_enc_block.2} parent=0 // pred_region
    _
  $region17: #{vqvae_enc_block.2} parent=0 // pred_fallthru
    _
  // Predicated region
  $region18: #{vqvae_enc_block.2} parent=0 // pred_check
    _
  $region19: #{vqvae_enc_block.2} parent=0 // pred_check_branch
    %386 = sbr.rel (0) target = $region21
  $region20: #{vqvae_enc_block.2} parent=0 // pred_region
    _
  $region21: #{vqvae_enc_block.2} parent=0 // pred_fallthru
    _
  // Predicated region
  $region22: #{vqvae_enc_block.2} parent=0 // pred_check
    _
  $region23: #{vqvae_enc_block.2} parent=0 // pred_check_branch
    %388 = sbr.rel (0) target = $region25
  $region24: #{vqvae_enc_block.2} parent=0 // pred_region
    _
  $region25: #{vqvae_enc_block.2} parent=0 // pred_fallthru
    _
  // Predicated region
  $region26: #{vqvae_enc_block.2} parent=0 // pred_check
    _
  $region27: #{vqvae_enc_block.2} parent=0 // pred_check_branch
    %390 = sbr.rel (0) target = $region29
  $region28: #{vqvae_enc_block.2} parent=0 // pred_region
    _
  $region29: #{vqvae_enc_block.2} parent=0 // pred_fallthru
    _
  // Predicated region
  $region30: #{vqvae_enc_block.2} parent=0 // pred_check
    _
  $region31: #{vqvae_enc_block.2} parent=0 // pred_check_branch
    %392 = sbr.rel (0) target = $region33
  $region32: #{vqvae_enc_block.2} parent=0 // pred_region
    _
  $region33: #{vqvae_enc_block.2} parent=0 // pred_fallthru
    _

</llo_original>
